<compile_context>
chip_gen: v6e
topology: v6e:2x2x1
jax: 0.10.0
libtpu: 0.0.40
codegen_flags: <defaults>
</compile_context>

<pallas_src>
import functools

import jax
import jax.numpy as jnp
from jax import lax
from jax.experimental import pallas as pl
from jax.experimental.pallas import tpu as pltpu


_INV_SQRT2 = 0.7071067811865476
_SQRT_2_OVER_PI = 0.7978845608028654


def _round_up(x, m):
    return (x + m - 1) // m * m


def _gelu_exact(x):
    # transformers ACT2FN["gelu"] == exact erf-based gelu (bit-matches the PyTorch module).
    return 0.5 * x * (1.0 + lax.erf(x * _INV_SQRT2))


def _gelu_tanh(x):
    # tanh-approx gelu: the tanh goes to the EUP (free slot here), keeping the VALU free.
    return 0.5 * x * (1.0 + jnp.tanh(_SQRT_2_OVER_PI * (x + 0.044715 * (x * x * x))))


def _vmem_capacity_bytes():
    # Conservative fallback (v7x per-TensorCore VMEM) if the trace-time query is unavailable.
    try:
        return int(pltpu.get_tpu_info().vmem_capacity_bytes)
    except Exception:
        return 64 << 20


def adapter_kernel(x_ref, wd_ref, bd_ref, wu_ref, bu_ref, g_ref, b_ref, o_ref,
                   *, eps, h_real, matmul_dtype, exact_gelu):
    xf = x_ref[...].astype(jnp.float32)                       # (tm, Hp) f32
    hp = xf.shape[-1]
    inv_h = 1.0 / h_real

    # --- pre-LayerNorm over the hidden axis, f32 statistics ---
    # Padded H columns of x are zero, so the plain sum already excludes them; only the
    # centered value needs masking so padded columns do not pollute the variance.
    # Zero-padded *rows* (N -> N_pad) give var=0; rsqrt(0+eps) is finite and those rows
    # are sliced off in the wrapper -- do not remove eps or the final [:N] slice.
    mean = jnp.sum(xf, axis=-1, keepdims=True) * inv_h
    xc = xf - mean
    if h_real != hp:
        mask = lax.broadcasted_iota(jnp.int32, xf.shape, 1) < h_real
        xc = jnp.where(mask, xc, 0.0)
    var = jnp.sum(xc * xc, axis=-1, keepdims=True) * inv_h
    h = xc * lax.rsqrt(var + eps)
    h = h * g_ref[...] + b_ref[...]                           # gamma/beta f32; padded cols stay 0

    # --- linear_down: (tm, Hp) @ (Hp, Ap); MXU operands in matmul_dtype, f32 accumulate ---
    h = jnp.dot(h.astype(matmul_dtype), wd_ref[...],
                preferred_element_type=jnp.float32) + bd_ref[...]

    # --- activation (padded adapter columns are exactly 0 and gelu(0)=0) ---
    h = _gelu_exact(h) if exact_gelu else _gelu_tanh(h)

    # --- linear_up: (tm, Ap) @ (Ap, Hp) ---
    h = jnp.dot(h.astype(matmul_dtype), wu_ref[...],
                preferred_element_type=jnp.float32) + bu_ref[...]

    # --- residual (f32); padded output columns end up exactly 0 and are sliced off ---
    o_ref[...] = (h + xf).astype(o_ref.dtype)


def prepare_adapter_params(w_down, b_down, w_up, b_up, ln_gamma, ln_beta,
                           *, matmul_dtype=jnp.bfloat16):
    """Pre-transpose / pad the PyTorch-layout parameters (do this once at weight-load time).

    w_down: (A, H) torch nn.Linear layout; w_up: (H, A).  Returns (wd, bd, wu, bu, g, b)
    with wd:(Hp, Ap), wu:(Ap, Hp) in `matmul_dtype`, Ap=round_up(A,128), Hp=round_up(H,128).
    Zero padding is a mathematical no-op and keeps MXU operands / output stores lane-dense.
    Biases and LayerNorm params stay f32.
    """
    A, H = w_down.shape
    Ap = _round_up(A, 128)
    Hp = _round_up(H, 128)
    wd = jnp.zeros((Hp, Ap), matmul_dtype).at[:H, :A].set(w_down.T.astype(matmul_dtype))
    wu = jnp.zeros((Ap, Hp), matmul_dtype).at[:A, :H].set(w_up.T.astype(matmul_dtype))
    bd = jnp.zeros((1, Ap), jnp.float32).at[:, :A].set(b_down.astype(jnp.float32))
    bu = jnp.zeros((1, Hp), jnp.float32).at[:, :H].set(b_up.astype(jnp.float32))
    g = jnp.zeros((1, Hp), jnp.float32).at[:, :H].set(ln_gamma.astype(jnp.float32))
    b = jnp.zeros((1, Hp), jnp.float32).at[:, :H].set(ln_beta.astype(jnp.float32))
    return wd, bd, wu, bu, g, b


def adapter_layer_prepared(hidden_states, wd, bd, wu, bu, g, b, *, eps=1e-5,
                           row_tile=None, vmem_budget_bytes=None, gelu="tanh"):
    """hidden_states: (B, S, H); parameters from prepare_adapter_params()."""
    B, S, H = hidden_states.shape
    Hp, Ap = wd.shape
    N = B * S
    x_item = jnp.dtype(hidden_states.dtype).itemsize
    w_item = jnp.dtype(wd.dtype).itemsize
    matmul_dtype = wd.dtype

    # ---- generation-aware VMEM budget / row tile ----
    cap = _vmem_capacity_bytes()                  # 64 MiB on v7x, 128 MiB on v5e/v6e
    small_vmem = cap <= (96 << 20)                # v7x-like (also the conservative fallback)
    if vmem_budget_bytes is None:
        vmem_budget_bytes = cap * 3 // 4          # ~48 MiB (v7x) / ~96 MiB (v5e/v6e)
    budget = min(int(vmem_budget_bytes), cap - (16 << 20))
    if row_tile is None:
        # HBM-bound kernel: large row tiles amortize the ~0.35 us per-grid-step overhead.
        row_tile = 512 if small_vmem else 1024

    # Sublane packing granularity: 8 rows (32-bit), 16 (16-bit), 32 (8-bit).
    sub = max(8, 32 // x_item)
    tm = min(_round_up(row_tile, sub), _round_up(N, sub))

    def vmem_bytes(t):
        acts = 2 * 2 * t * Hp * x_item            # x + out tiles, double-buffered
        weights = 2 * Hp * Ap * w_item            # W_down^T + W_up^T, single-buffered
        vectors = (Ap + 3 * Hp) * 4               # biases / gamma / beta, single-buffered
        work = (2 * t * Hp + t * Ap) * 4          # f32 intermediates
        return acts + weights + vectors + work

    # Shrink the row tile until the working set fits the budget.
    # TODO(synk): add a second grid axis tiling W_down/W_up over Ap (accumulating the
    # up-projection) for configs where resident weights alone exceed ~half the budget
    # (very large H*A on v7x); the tm-shrink loop cannot help in that regime.
    while tm > sub and vmem_bytes(tm) > budget:
        tm = max(sub, _round_up(tm // 2, sub))

    # v7x has 2 TensorCores: ensure the ("parallel",) grid has >= 2 steps so both get rows.
    if small_vmem:
        while tm > sub and _round_up(N, tm) // tm < 2:
            tm = max(sub, _round_up(tm // 2, sub))

    N_pad = _round_up(N, tm)
    x2d = hidden_states.reshape(N, H)
    if N_pad != N or Hp != H:
        x2d = jnp.pad(x2d, ((0, N_pad - N), (0, Hp - H)))

    grid = (N_pad // tm,)
    # Limit tied to the budget + headroom; never below the working set, never near physical.
    vmem_limit = int(max(32 << 20, min(vmem_bytes(tm) + (8 << 20), cap - (12 << 20))))

    exact_gelu = (gelu == "exact")
    cost = pl.CostEstimate(
        flops=4 * N_pad * Hp * Ap,
        transcendentals=(N_pad * (Ap + 1)) if not exact_gelu else N_pad,
        bytes_accessed=2 * N_pad * Hp * x_item + 2 * Hp * Ap * w_item + (Ap + 3 * Hp) * 4,
    )

    invariant = pl.Buffered(1)   # grid-invariant blocks: one DMA, one VMEM buffer

    out2d = pl.pallas_call(
        functools.partial(adapter_kernel, eps=eps, h_real=H,
                          matmul_dtype=matmul_dtype, exact_gelu=exact_gelu),
        out_shape=jax.ShapeDtypeStruct((N_pad, Hp), hidden_states.dtype),
        grid_spec=pltpu.PrefetchScalarGridSpec(
            num_scalar_prefetch=0,
            grid=grid,
            in_specs=[
                pl.BlockSpec((tm, Hp), lambda i: (i, 0)),                            # x tile
                pl.BlockSpec((Hp, Ap), lambda i: (0, 0), pipeline_mode=invariant),   # W_down^T
                pl.BlockSpec((1, Ap), lambda i: (0, 0), pipeline_mode=invariant),    # b_down
                pl.BlockSpec((Ap, Hp), lambda i: (0, 0), pipeline_mode=invariant),   # W_up^T
                pl.BlockSpec((1, Hp), lambda i: (0, 0), pipeline_mode=invariant),    # b_up
                pl.BlockSpec((1, Hp), lambda i: (0, 0), pipeline_mode=invariant),    # ln gamma
                pl.BlockSpec((1, Hp), lambda i: (0, 0), pipeline_mode=invariant),    # ln beta
            ],
            out_specs=pl.BlockSpec((tm, Hp), lambda i: (i, 0)),
        ),
        compiler_params=pltpu.CompilerParams(
            dimension_semantics=("parallel",),
            vmem_limit_bytes=vmem_limit,
        ),
        cost_estimate=cost,
    )(x2d, wd, bd, wu, bu, g, b)

    if N_pad != N or Hp != H:
        out2d = out2d[:N, :H]
    return out2d.reshape(B, S, H)


def adapter_layer(hidden_states, w_down, b_down, w_up, b_up, ln_gamma, ln_beta,
                  *, eps=1e-5, row_tile=None, matmul_dtype=jnp.bfloat16, gelu="tanh"):
    """Convenience wrapper (jit it, or call prepare_adapter_params once at weight-load time)."""
    params = prepare_adapter_params(w_down, b_down, w_up, b_up, ln_gamma, ln_beta,
                                    matmul_dtype=matmul_dtype)
    return adapter_layer_prepared(hidden_states, *params, eps=eps, row_tile=row_tile,
                                  gelu=gelu)


def _reference(x, w_down, b_down, w_up, b_up, g, b, eps=1e-5, exact_gelu=True):
    # Pure-JAX reference matching the PyTorch module (pre-norm), f32 math.
    x = x.astype(jnp.float32)
    mean = jnp.mean(x, -1, keepdims=True)
    var = jnp.mean((x - mean) ** 2, -1, keepdims=True)
    h = (x - mean) / jnp.sqrt(var + eps) * g + b
    h = h @ w_down.T.astype(jnp.float32) + b_down
    h = _gelu_exact(h) if exact_gelu else _gelu_tanh(h)
    h = h @ w_up.T.astype(jnp.float32) + b_up
    return h + x


if __name__ == "__main__":
    eps = 1e-5
    key = jax.random.PRNGKey(0)
    kx, k1, k2, k3, k4, kx2 = jax.random.split(key, 6)

    # Small config consistent with the module: hidden_size=32, adapter_emb_size[layer]=16.
    B, S, H, A = 2, 8, 32, 16
    x = jax.random.normal(kx, (B, S, H), dtype=jnp.float32)
    w_down = jax.random.normal(k1, (A, H), dtype=jnp.float32) * (1.0 / jnp.sqrt(H))
    b_down = jax.random.normal(k2, (A,), dtype=jnp.float32) * 0.01
    w_up = jax.random.normal(k3, (H, A), dtype=jnp.float32) * (1.0 / jnp.sqrt(A))
    b_up = jax.random.normal(k4, (H,), dtype=jnp.float32) * 0.01
    ln_gamma = jnp.ones((H,), dtype=jnp.float32)
    ln_beta = jnp.zeros((H,), dtype=jnp.float32)

    # 1) Strict check: f32 MXU operands + exact erf gelu (bit-matches the PyTorch module).
    fwd_exact = jax.jit(functools.partial(
        adapter_layer, eps=eps, matmul_dtype=jnp.float32, gelu="exact"))
    out = jax.block_until_ready(fwd_exact(x, w_down, b_down, w_up, b_up, ln_gamma, ln_beta))
    ref = _reference(x, w_down, b_down, w_up, b_up, ln_gamma, ln_beta, eps=eps)
    assert out.shape == (B, S, H)
    assert jnp.allclose(out, ref, atol=1e-4, rtol=1e-4), "f32/exact-gelu mismatch vs reference"

    # 2) Remainder path: batch*seq not a multiple of the row tile / sublane count.
    Bo, So = 3, 5
    xo = jax.random.normal(kx2, (Bo, So, H), dtype=jnp.float32)
    out_o = jax.block_until_ready(
        fwd_exact(xo, w_down, b_down, w_up, b_up, ln_gamma, ln_beta))
    ref_o = _reference(xo, w_down, b_down, w_up, b_up, ln_gamma, ln_beta, eps=eps)
    assert out_o.shape == (Bo, So, H)
    assert jnp.allclose(out_o, ref_o, atol=1e-4, rtol=1e-4), "remainder-path mismatch"

    # 3) Default fast path: bf16 MXU operands + tanh gelu (EUP), f32 LN/accumulation.
    fwd_fast = jax.jit(functools.partial(adapter_layer, eps=eps))
    x_bf = x.astype(jnp.bfloat16)
    out_bf = jax.block_until_ready(
        fwd_fast(x_bf, w_down.astype(jnp.bfloat16), b_down,
                 w_up.astype(jnp.bfloat16), b_up, ln_gamma, ln_beta))
    ref_bf = _reference(x_bf, w_down.astype(jnp.bfloat16), b_down,
                        w_up.astype(jnp.bfloat16), b_up, ln_gamma, ln_beta,
                        eps=eps, exact_gelu=False)
    assert out_bf.shape == (B, S, H)
    assert jnp.allclose(out_bf.astype(jnp.float32), ref_bf, atol=5e-2, rtol=5e-2), \
        "bf16/tanh-gelu mismatch vs reference"

    print("KERNEL_OK")
</pallas_src>

<mosaic_0001>
module attributes {stable_mosaic.version = 11 : i64} {
  func.func @adapter_kernel(%arg0: i32, %arg1: memref<8x128xf32, #tpu.memory_space<vmem>>, %arg2: memref<128x128xf32, #tpu.memory_space<vmem>>, %arg3: memref<1x128xf32, #tpu.memory_space<vmem>>, %arg4: memref<128x128xf32, #tpu.memory_space<vmem>>, %arg5: memref<1x128xf32, #tpu.memory_space<vmem>>, %arg6: memref<1x128xf32, #tpu.memory_space<vmem>>, %arg7: memref<1x128xf32, #tpu.memory_space<vmem>>, %arg8: memref<8x128xf32, #tpu.memory_space<vmem>>) attributes {dimension_semantics = [#tpu.dimension_semantics<parallel>], iteration_bounds = array<i64: 2>, scalar_prefetch = 0 : i64, scratch_operands = 0 : i64, tpu.core_type = #tpu.core_type<tc>, window_params = [{transform_indices = @transform_0, window_bounds = array<i64: 8, 128>}, {pipeline_mode = #tpu.pipeline_mode<synchronous>, transform_indices = @transform_1, window_bounds = array<i64: 128, 128>}, {pipeline_mode = #tpu.pipeline_mode<synchronous>, transform_indices = @transform_2, window_bounds = array<i64: 1, 128>}, {pipeline_mode = #tpu.pipeline_mode<synchronous>, transform_indices = @transform_3, window_bounds = array<i64: 128, 128>}, {pipeline_mode = #tpu.pipeline_mode<synchronous>, transform_indices = @transform_4, window_bounds = array<i64: 1, 128>}, {pipeline_mode = #tpu.pipeline_mode<synchronous>, transform_indices = @transform_5, window_bounds = array<i64: 1, 128>}, {pipeline_mode = #tpu.pipeline_mode<synchronous>, transform_indices = @transform_6, window_bounds = array<i64: 1, 128>}, {transform_indices = @transform_7, window_bounds = array<i64: 8, 128>}]} {
    %c0 = arith.constant 0 : index
    %c0_0 = arith.constant 0 : index
    %0 = vector.load %arg1[%c0, %c0_0] : memref<8x128xf32, #tpu.memory_space<vmem>>, vector<8x128xf32>
    %cst = arith.constant dense<0.000000e+00> : vector<8xf32>
    %1 = vector.multi_reduction <add>, %0, %cst [1] : vector<8x128xf32> to vector<8xf32>
    %2 = vector.shape_cast %1 : vector<8xf32> to vector<8x1xf32>
    %cst_1 = arith.constant 3.125000e-02 : f32
    %3 = vector.broadcast %cst_1 : f32 to vector<8x1xf32>
    %4 = arith.mulf %2, %3 : vector<8x1xf32>
    %5 = vector.broadcast %4 : vector<8x1xf32> to vector<8x128xf32>
    %6 = arith.subf %0, %5 : vector<8x128xf32>
    %7 = tpu.iota {dimensions = array<i32: 1>} : vector<8x128xi32>
    %c32_i32 = arith.constant 32 : i32
    %8 = vector.broadcast %c32_i32 : i32 to vector<8x128xi32>
    %9 = arith.cmpi slt, %7, %8 : vector<8x128xi32>
    %cst_2 = arith.constant 0.000000e+00 : f32
    %10 = vector.broadcast %cst_2 : f32 to vector<8x128xf32>
    %11 = arith.select %9, %6, %10 : vector<8x128xi1>, vector<8x128xf32>
    %12 = arith.mulf %11, %11 : vector<8x128xf32>
    %cst_3 = arith.constant dense<0.000000e+00> : vector<8xf32>
    %13 = vector.multi_reduction <add>, %12, %cst_3 [1] : vector<8x128xf32> to vector<8xf32>
    %14 = vector.shape_cast %13 : vector<8xf32> to vector<8x1xf32>
    %cst_4 = arith.constant 3.125000e-02 : f32
    %15 = vector.broadcast %cst_4 : f32 to vector<8x1xf32>
    %16 = arith.mulf %14, %15 : vector<8x1xf32>
    %cst_5 = arith.constant 9.99999974E-6 : f32
    %17 = vector.broadcast %cst_5 : f32 to vector<8x1xf32>
    %18 = arith.addf %16, %17 : vector<8x1xf32>
    %19 = math.rsqrt %18 : vector<8x1xf32>
    %20 = vector.broadcast %19 : vector<8x1xf32> to vector<8x128xf32>
    %21 = arith.mulf %11, %20 : vector<8x128xf32>
    %c0_6 = arith.constant 0 : index
    %c0_7 = arith.constant 0 : index
    %22 = vector.load %arg6[%c0_6, %c0_7] : memref<1x128xf32, #tpu.memory_space<vmem>>, vector<1x128xf32>
    %23 = vector.broadcast %22 : vector<1x128xf32> to vector<8x128xf32>
    %24 = arith.mulf %21, %23 : vector<8x128xf32>
    %c0_8 = arith.constant 0 : index
    %c0_9 = arith.constant 0 : index
    %25 = vector.load %arg7[%c0_8, %c0_9] : memref<1x128xf32, #tpu.memory_space<vmem>>, vector<1x128xf32>
    %26 = vector.broadcast %25 : vector<1x128xf32> to vector<8x128xf32>
    %27 = arith.addf %24, %26 : vector<8x128xf32>
    %c0_10 = arith.constant 0 : index
    %c0_11 = arith.constant 0 : index
    %28 = vector.load %arg2[%c0_10, %c0_11] : memref<128x128xf32, #tpu.memory_space<vmem>>, vector<128x128xf32>
    %cst_12 = arith.constant dense<0.000000e+00> : vector<8x128xf32>
    %29 = tpu.matmul %27, %28, %cst_12 {dimension_numbers = #tpu.dot_dimension_numbers<[1], [0], [0], [1], [0, 0, 1, 1], [], []>} : vector<8x128xf32>, vector<128x128xf32>, vector<8x128xf32> -> vector<8x128xf32>
    %c0_13 = arith.constant 0 : index
    %c0_14 = arith.constant 0 : index
    %30 = vector.load %arg3[%c0_13, %c0_14] : memref<1x128xf32, #tpu.memory_space<vmem>>, vector<1x128xf32>
    %31 = vector.broadcast %30 : vector<1x128xf32> to vector<8x128xf32>
    %32 = arith.addf %29, %31 : vector<8x128xf32>
    %cst_15 = arith.constant 5.000000e-01 : f32
    %33 = vector.broadcast %cst_15 : f32 to vector<8x128xf32>
    %34 = arith.mulf %33, %32 : vector<8x128xf32>
    %cst_16 = arith.constant 0.707106769 : f32
    %35 = vector.broadcast %cst_16 : f32 to vector<8x128xf32>
    %36 = arith.mulf %32, %35 : vector<8x128xf32>
    %37 = math.erf %36 : vector<8x128xf32>
    %cst_17 = arith.constant 1.000000e+00 : f32
    %38 = vector.broadcast %cst_17 : f32 to vector<8x128xf32>
    %39 = arith.addf %38, %37 : vector<8x128xf32>
    %40 = arith.mulf %34, %39 : vector<8x128xf32>
    %c0_18 = arith.constant 0 : index
    %c0_19 = arith.constant 0 : index
    %41 = vector.load %arg4[%c0_18, %c0_19] : memref<128x128xf32, #tpu.memory_space<vmem>>, vector<128x128xf32>
    %cst_20 = arith.constant dense<0.000000e+00> : vector<8x128xf32>
    %42 = tpu.matmul %40, %41, %cst_20 {dimension_numbers = #tpu.dot_dimension_numbers<[1], [0], [0], [1], [0, 0, 1, 1], [], []>} : vector<8x128xf32>, vector<128x128xf32>, vector<8x128xf32> -> vector<8x128xf32>
    %c0_21 = arith.constant 0 : index
    %c0_22 = arith.constant 0 : index
    %43 = vector.load %arg5[%c0_21, %c0_22] : memref<1x128xf32, #tpu.memory_space<vmem>>, vector<1x128xf32>
    %44 = vector.broadcast %43 : vector<1x128xf32> to vector<8x128xf32>
    %45 = arith.addf %42, %44 : vector<8x128xf32>
    %46 = arith.addf %45, %0 : vector<8x128xf32>
    %c0_23 = arith.constant 0 : index
    %c0_24 = arith.constant 0 : index
    %47 = vector.load %arg8[%c0_23, %c0_24] : memref<8x128xf32, #tpu.memory_space<vmem>>, vector<8x128xf32>
    tpu.vector_store %arg8[%c0_23, %c0_24], %46 {strides = array<i32>} : memref<8x128xf32, #tpu.memory_space<vmem>>, vector<8x128xf32>,
    return
  }
  func.func @transform_0(%arg0: i32) -> (i32, i32) {
    %c0_i32 = arith.constant 0 : i32
    %c0_i32_0 = arith.constant 0 : i32
    return %arg0, %c0_i32 : i32, i32
  }
  func.func @transform_1(%arg0: i32) -> (i32, i32) {
    %c0_i32 = arith.constant 0 : i32
    %c0_i32_0 = arith.constant 0 : i32
    %c0_i32_1 = arith.constant 0 : i32
    return %c0_i32, %c0_i32_0 : i32, i32
  }
  func.func @transform_2(%arg0: i32) -> (i32, i32) {
    %c0_i32 = arith.constant 0 : i32
    %c0_i32_0 = arith.constant 0 : i32
    %c0_i32_1 = arith.constant 0 : i32
    return %c0_i32, %c0_i32_0 : i32, i32
  }
  func.func @transform_3(%arg0: i32) -> (i32, i32) {
    %c0_i32 = arith.constant 0 : i32
    %c0_i32_0 = arith.constant 0 : i32
    %c0_i32_1 = arith.constant 0 : i32
    return %c0_i32, %c0_i32_0 : i32, i32
  }
  func.func @transform_4(%arg0: i32) -> (i32, i32) {
    %c0_i32 = arith.constant 0 : i32
    %c0_i32_0 = arith.constant 0 : i32
    %c0_i32_1 = arith.constant 0 : i32
    return %c0_i32, %c0_i32_0 : i32, i32
  }
  func.func @transform_5(%arg0: i32) -> (i32, i32) {
    %c0_i32 = arith.constant 0 : i32
    %c0_i32_0 = arith.constant 0 : i32
    %c0_i32_1 = arith.constant 0 : i32
    return %c0_i32, %c0_i32_0 : i32, i32
  }
  func.func @transform_6(%arg0: i32) -> (i32, i32) {
    %c0_i32 = arith.constant 0 : i32
    %c0_i32_0 = arith.constant 0 : i32
    %c0_i32_1 = arith.constant 0 : i32
    return %c0_i32, %c0_i32_0 : i32, i32
  }
  func.func @transform_7(%arg0: i32) -> (i32, i32) {
    %c0_i32 = arith.constant 0 : i32
    %c0_i32_0 = arith.constant 0 : i32
    return %arg0, %c0_i32 : i32, i32
  }
}

</mosaic_0001>

<llo_original>
// kernel: adapter_layer.1
$region0: #{adapter_layer.1}
  #allocation0 [shape = 'u32[]', space=smem, size = 0x4, offset = 0x4, fixed_abs, tag = 'smem constant byte address 0x4 - core index']
  #allocation1 [shape = 'u32[144,128]{1,0:T(1,128)}', space=vmem, size = 0x12000, scoped, tag = 'internal scratch']
  %s0 = inlined_call_operand.vmem [shape: f32[16,128], index: 0, kind: input, shape index: {}]
  %s1 = inlined_call_operand.vmem [shape: f32[128,128], index: 1, kind: input, shape index: {}]
  %s2 = inlined_call_operand.vmem [shape: f32[1,128], index: 2, kind: input, shape index: {}]
  %s3 = inlined_call_operand.vmem [shape: f32[128,128], index: 3, kind: input, shape index: {}]
  %s4 = inlined_call_operand.vmem [shape: f32[1,128], index: 4, kind: input, shape index: {}]
  %s5 = inlined_call_operand.vmem [shape: f32[1,128], index: 5, kind: input, shape index: {}]
  %s6 = inlined_call_operand.vmem [shape: f32[1,128], index: 6, kind: input, shape index: {}]
  %s7 = inlined_call_operand.vmem [shape: f32[16,128], index: 7, kind: output, shape index: {}]
  %s8 = sld [smem:[#allocation0]]
  $region61: #{adapter_layer.1} parent=0
    _
  %s10 = ssub.s32 1, %s8
  %s11 = scalar_select 0, %s10, %s8
  loop: start=0, step=1, limit=4
  $region2: #{adapter_layer.1} parent=0 // loop_pre_header
    _
  $region3: #{adapter_layer.1} parent=0 // loop_header
    %s13 = sphi 0, %s17
    %p14 = scmp.ge.s32.totalorder %s13, 4
    %s23 = sphi 0, %s25
    %s26 = sphi 0, %s23
    %s27 = sphi 0, %s26
    %s43 = sphi 0, %s27
    %s47 = sphi 0, %s47
    %s49 = sphi 0, %s47
    %s50 = sphi 0, %s49
    %s64 = sphi 0, %s50
    %s68 = sphi 0, %s68
    %s70 = sphi 0, %s68
    %s71 = sphi 0, %s70
    %s85 = sphi 0, %s71
    %s89 = sphi 0, %s89
    %s91 = sphi 0, %s89
    %s92 = sphi 0, %s91
    %s106 = sphi 0, %s92
    %s110 = sphi 0, %s110
    %s112 = sphi 0, %s110
    %s113 = sphi 0, %s112
    %s127 = sphi 0, %s113
    %s131 = sphi 0, %s131
    %s133 = sphi 0, %s131
    %s134 = sphi 0, %s133
    %s148 = sphi 0, %s134
    %s152 = sphi 0, %s152
    %s154 = sphi 0, %s152
    %s155 = sphi 0, %s154
    %s169 = sphi 0, %s155
    %s175 = sphi 0, %s177
    %s178 = sphi 0, %s175
    %s179 = sphi 0, %s178
    %s195 = sphi 0, %s179
  $region4: #{adapter_layer.1} parent=0 // loop_header_branch
    %16 = sbr.rel (%p14) target = $region8
  $region5: #{adapter_layer.1} parent=0 // loop_body
    %s18 = ssub.s32 %s13, 1
    %s19 = ssub.s32 %s13, 2
    %s20 = sadd.s32 %s13, 1
    %s21 = ssub.s32 %s13, %s20
    %p22 = scmp.eq.s32.totalorder %s21, 0
    %s24 = sadd.s32 %s23, 1
    %s25 = scalar_select %p22, %s23, %s24
    %p28 = pneg %p22
    %p29 = scmp.eq.s32.totalorder %s13, 1
    %p30 = por %p28, %p29
    %p31 = scmp.ne.s32.totalorder %s23, %s26
    %p32 = scmp.eq.s32.totalorder %s13, 0
    %p33 = por %p31, %p32
    %p34 = scmp.ne.s32.totalorder %s23, %s26
    %p35 = scmp.eq.s32.totalorder %s18, 1
    %p36 = por %p34, %p35
    %p37 = scmp.ne.s32.totalorder %s26, %s27
    %p38 = scmp.eq.s32.totalorder %s18, 0
    %p39 = por %p37, %p38
    %p40 = scmp.ne.s32.totalorder %s26, %s27
    %p41 = scmp.eq.s32.totalorder %s19, 1
    %p42 = por %p40, %p41
    %p44 = scmp.ne.s32.totalorder %s27, %s43
    %p45 = scmp.eq.s32.totalorder %s19, 0
    %p46 = por %p44, %p45
    %s48 = sadd.s32 %s47, 1
    %p51 = scmp.eq.s32.totalorder %s13, 1
    %p52 = scmp.ne.s32.totalorder %s47, %s49
    %p53 = scmp.eq.s32.totalorder %s13, 0
    %p54 = por %p52, %p53
    %p55 = scmp.ne.s32.totalorder %s47, %s49
    %p56 = scmp.eq.s32.totalorder %s18, 1
    %p57 = por %p55, %p56
    %p58 = scmp.ne.s32.totalorder %s49, %s50
    %p59 = scmp.eq.s32.totalorder %s18, 0
    %p60 = por %p58, %p59
    %p61 = scmp.ne.s32.totalorder %s49, %s50
    %p62 = scmp.eq.s32.totalorder %s19, 1
    %p63 = por %p61, %p62
    %p65 = scmp.ne.s32.totalorder %s50, %s64
    %p66 = scmp.eq.s32.totalorder %s19, 0
    %p67 = por %p65, %p66
    %s69 = sadd.s32 %s68, 1
    %p72 = scmp.eq.s32.totalorder %s13, 1
    %p73 = scmp.ne.s32.totalorder %s68, %s70
    %p74 = scmp.eq.s32.totalorder %s13, 0
    %p75 = por %p73, %p74
    %p76 = scmp.ne.s32.totalorder %s68, %s70
    %p77 = scmp.eq.s32.totalorder %s18, 1
    %p78 = por %p76, %p77
    %p79 = scmp.ne.s32.totalorder %s70, %s71
    %p80 = scmp.eq.s32.totalorder %s18, 0
    %p81 = por %p79, %p80
    %p82 = scmp.ne.s32.totalorder %s70, %s71
    %p83 = scmp.eq.s32.totalorder %s19, 1
    %p84 = por %p82, %p83
    %p86 = scmp.ne.s32.totalorder %s71, %s85
    %p87 = scmp.eq.s32.totalorder %s19, 0
    %p88 = por %p86, %p87
    %s90 = sadd.s32 %s89, 1
    %p93 = scmp.eq.s32.totalorder %s13, 1
    %p94 = scmp.ne.s32.totalorder %s89, %s91
    %p95 = scmp.eq.s32.totalorder %s13, 0
    %p96 = por %p94, %p95
    %p97 = scmp.ne.s32.totalorder %s89, %s91
    %p98 = scmp.eq.s32.totalorder %s18, 1
    %p99 = por %p97, %p98
    %p100 = scmp.ne.s32.totalorder %s91, %s92
    %p101 = scmp.eq.s32.totalorder %s18, 0
    %p102 = por %p100, %p101
    %p103 = scmp.ne.s32.totalorder %s91, %s92
    %p104 = scmp.eq.s32.totalorder %s19, 1
    %p105 = por %p103, %p104
    %p107 = scmp.ne.s32.totalorder %s92, %s106
    %p108 = scmp.eq.s32.totalorder %s19, 0
    %p109 = por %p107, %p108
    %s111 = sadd.s32 %s110, 1
    %p114 = scmp.eq.s32.totalorder %s13, 1
    %p115 = scmp.ne.s32.totalorder %s110, %s112
    %p116 = scmp.eq.s32.totalorder %s13, 0
    %p117 = por %p115, %p116
    %p118 = scmp.ne.s32.totalorder %s110, %s112
    %p119 = scmp.eq.s32.totalorder %s18, 1
    %p120 = por %p118, %p119
    %p121 = scmp.ne.s32.totalorder %s112, %s113
    %p122 = scmp.eq.s32.totalorder %s18, 0
    %p123 = por %p121, %p122
    %p124 = scmp.ne.s32.totalorder %s112, %s113
    %p125 = scmp.eq.s32.totalorder %s19, 1
    %p126 = por %p124, %p125
    %p128 = scmp.ne.s32.totalorder %s113, %s127
    %p129 = scmp.eq.s32.totalorder %s19, 0
    %p130 = por %p128, %p129
    %s132 = sadd.s32 %s131, 1
    %p135 = scmp.eq.s32.totalorder %s13, 1
    %p136 = scmp.ne.s32.totalorder %s131, %s133
    %p137 = scmp.eq.s32.totalorder %s13, 0
    %p138 = por %p136, %p137
    %p139 = scmp.ne.s32.totalorder %s131, %s133
    %p140 = scmp.eq.s32.totalorder %s18, 1
    %p141 = por %p139, %p140
    %p142 = scmp.ne.s32.totalorder %s133, %s134
    %p143 = scmp.eq.s32.totalorder %s18, 0
    %p144 = por %p142, %p143
    %p145 = scmp.ne.s32.totalorder %s133, %s134
    %p146 = scmp.eq.s32.totalorder %s19, 1
    %p147 = por %p145, %p146
    %p149 = scmp.ne.s32.totalorder %s134, %s148
    %p150 = scmp.eq.s32.totalorder %s19, 0
    %p151 = por %p149, %p150
    %s153 = sadd.s32 %s152, 1
    %p156 = scmp.eq.s32.totalorder %s13, 1
    %p157 = scmp.ne.s32.totalorder %s152, %s154
    %p158 = scmp.eq.s32.totalorder %s13, 0
    %p159 = por %p157, %p158
    %p160 = scmp.ne.s32.totalorder %s152, %s154
    %p161 = scmp.eq.s32.totalorder %s18, 1
    %p162 = por %p160, %p161
    %p163 = scmp.ne.s32.totalorder %s154, %s155
    %p164 = scmp.eq.s32.totalorder %s18, 0
    %p165 = por %p163, %p164
    %p166 = scmp.ne.s32.totalorder %s154, %s155
    %p167 = scmp.eq.s32.totalorder %s19, 1
    %p168 = por %p166, %p167
    %p170 = scmp.ne.s32.totalorder %s155, %s169
    %p171 = scmp.eq.s32.totalorder %s19, 0
    %p172 = por %p170, %p171
    %s173 = ssub.s32 %s13, %s20
    %p174 = scmp.eq.s32.totalorder %s173, 0
    %s176 = sadd.s32 %s175, 1
    %s177 = scalar_select %p174, %s175, %s176
    %p180 = pneg %p174
    %p181 = scmp.eq.s32.totalorder %s13, 1
    %p182 = por %p180, %p181
    %p183 = scmp.ne.s32.totalorder %s175, %s178
    %p184 = scmp.eq.s32.totalorder %s13, 0
    %p185 = por %p183, %p184
    %p186 = scmp.ne.s32.totalorder %s175, %s178
    %p187 = scmp.eq.s32.totalorder %s18, 1
    %p188 = por %p186, %p187
    %p189 = scmp.ne.s32.totalorder %s178, %s179
    %p190 = scmp.eq.s32.totalorder %s18, 0
    %p191 = por %p189, %p190
    %p192 = scmp.ne.s32.totalorder %s178, %s179
    %p193 = scmp.eq.s32.totalorder %s19, 1
    %p194 = por %p192, %p193
    %p196 = scmp.ne.s32.totalorder %s179, %s195
    %p197 = scmp.eq.s32.totalorder %s19, 0
    %p198 = por %p196, %p197
    %p199 = scmp.le.s32.totalorder 1, %s13
    %p200 = scmp.lt.s32.totalorder %s13, 3
    %p201 = pnand %p199, %p200
    %p202 = pneg %p201
    // Predicated region
    $region9: #{adapter_layer.1} parent=5 // pred_check
      _
    $region10: #{adapter_layer.1} parent=5 // pred_check_branch
      %204 = sbr.rel (%p201) target = $region12
    $region11: #{adapter_layer.1} parent=5 // pred_region
      %s205 = ssub.s32 %s13, 1
      // Predicated region
      $region13: #{adapter_layer.1} parent=11 // pred_check
        %p206 = pneg %p60
      $region14: #{adapter_layer.1} parent=11 // pred_check_branch
        %208 = sbr.rel (%p206) target = $region16
      $region15: #{adapter_layer.1} parent=11 // pred_region
        _
      $region16: #{adapter_layer.1} parent=11 // pred_fallthru
        _
      // Predicated region
      $region17: #{adapter_layer.1} parent=11 // pred_check
        %p209 = pneg %p81
      $region18: #{adapter_layer.1} parent=11 // pred_check_branch
        %211 = sbr.rel (%p209) target = $region20
      $region19: #{adapter_layer.1} parent=11 // pred_region
        _
      $region20: #{adapter_layer.1} parent=11 // pred_fallthru
        _
      // Predicated region
      $region21: #{adapter_layer.1} parent=11 // pred_check
        %p212 = pneg %p102
      $region22: #{adapter_layer.1} parent=11 // pred_check_branch
        %214 = sbr.rel (%p212) target = $region24
      $region23: #{adapter_layer.1} parent=11 // pred_region
        _
      $region24: #{adapter_layer.1} parent=11 // pred_fallthru
        _
      // Predicated region
      $region25: #{adapter_layer.1} parent=11 // pred_check
        %p215 = pneg %p123
      $region26: #{adapter_layer.1} parent=11 // pred_check_branch
        %217 = sbr.rel (%p215) target = $region28
      $region27: #{adapter_layer.1} parent=11 // pred_region
        _
      $region28: #{adapter_layer.1} parent=11 // pred_fallthru
        _
      // Predicated region
      $region29: #{adapter_layer.1} parent=11 // pred_check
        %p218 = pneg %p144
      $region30: #{adapter_layer.1} parent=11 // pred_check_branch
        %220 = sbr.rel (%p218) target = $region32
      $region31: #{adapter_layer.1} parent=11 // pred_region
        _
      $region32: #{adapter_layer.1} parent=11 // pred_fallthru
        _
      // Predicated region
      $region33: #{adapter_layer.1} parent=11 // pred_check
        %p221 = pneg %p165
      $region34: #{adapter_layer.1} parent=11 // pred_check_branch
        %223 = sbr.rel (%p221) target = $region36
      $region35: #{adapter_layer.1} parent=11 // pred_region
        _
      $region36: #{adapter_layer.1} parent=11 // pred_fallthru
        _
    $region12: #{adapter_layer.1} parent=5 // pred_fallthru
      _
    %p224 = scmp.lt.s32.totalorder %s13, 2
    // Predicated region
    $region37: #{adapter_layer.1} parent=5 // pred_check
      %p225 = pneg %p224
    $region38: #{adapter_layer.1} parent=5 // pred_check_branch
      %227 = sbr.rel (%p225) target = $region40
    $region39: #{adapter_layer.1} parent=5 // pred_region
      // Predicated region
      $region41: #{adapter_layer.1} parent=39 // pred_check
        %p228 = pneg %p33
      $region42: #{adapter_layer.1} parent=39 // pred_check_branch
        %230 = sbr.rel (%p228) target = $region44
      $region43: #{adapter_layer.1} parent=39 // pred_region
        %p231 = scmp.lt.s32.totalorder %s13, 1
        %s232 = scalar_select %p231, %s13, 1
        %s233 = smul.addr %s232, 8
        %s234 = scalar_lea.vmem %s0, %s233
      $region44: #{adapter_layer.1} parent=39 // pred_fallthru
        _
    $region40: #{adapter_layer.1} parent=5 // pred_fallthru
      _
    %p235 = scmp.le.s32.totalorder 1, %s13
    %p236 = scmp.lt.s32.totalorder %s13, 3
    %p237 = pnand %p235, %p236
    %p238 = pneg %p237
    // Predicated region
    $region45: #{adapter_layer.1} parent=5 // pred_check
      _
    $region46: #{adapter_layer.1} parent=5 // pred_check_branch
      %240 = sbr.rel (%p237) target = $region48
    $region47: #{adapter_layer.1} parent=5 // pred_region
      %s241 = ssub.s32 %s13, 1
      %p242 = scmp.lt.s32.totalorder %s18, 1
      %s243 = scalar_select %p242, %s18, 1
      %s244 = smul.addr %s243, 8
      %s245 = scalar_lea.vmem %s0, %s244
      %p246 = pneg %p39
      %p247 = pneg %p36
      %p248 = pneg %p60
      %p249 = pneg %p57
      %p250 = pneg %p81
      %p251 = pneg %p78
      %p252 = pneg %p102
      %p253 = pneg %p99
      %p254 = pneg %p123
      %p255 = pneg %p120
      %p256 = pneg %p144
      %p257 = pneg %p141
      %p258 = pneg %p165
      %p259 = pneg %p162
      %p260 = pneg %p191
      %p261 = pneg %p188
      %p262 = scmp.lt.s32.totalorder %s18, 1
      %s263 = scalar_select %p262, %s18, 1
      %s264 = smul.addr %s263, 8
      %s265 = scalar_lea.vmem %s7, %s264
      %p266 = scmp.lt.s32.totalorder %s18, 1
      %s267 = scalar_select %p266, %s18, 1
      %s268 = smul.addr %s267, 8
      %s269 = scalar_lea.vmem %s0, %s268
      %p270 = scmp.lt.s32.totalorder %s18, 1
      %s271 = scalar_select %p270, %s18, 1
      %s272 = smul.addr %s271, 8
      %s273 = scalar_lea.vmem %s7, %s272
      %v274 = vld [vmem:[%s269] sm:$0xff]
      %275 = vadd.xlane.f32.xlu0 %v274
      %v276 = vpop.xlane.xlu0 %275
      %v277 = vmul.f32 %v276, 0.03125
      %v278 = vsub.f32 %v274, %v277
      %v279 = vlaneseq
      %v280 = vand.u32 %v279, 127
      %vm281 = vcmp.lt.s32.totalorder %v280, 32
      %v282 = vsel %vm281, %v278, 0.0
      %v283 = vmul.f32 %v282, %v282
      %284 = vadd.xlane.f32.xlu0 %v283
      %v285 = vpop.xlane.xlu0 %284
      %v286 = vmul.f32 %v285, 0.03125
      %v287 = vadd.f32 %v286, 1e-05
      %v288 = vrsqrt.pop %v287
      %v289 = vmul.f32 %v282, %v288
      %v290 = vld [vmem:[%s5] sm:$0x1]
      %v292 = vlaneseq
      %v293 = vshrl.u32 %v292, 7
      %v294 = vsub.s32 0, %v293
      %v295 = vrot.slane %v290, %v294
      %v297 = vmul.f32 %v289, %v295
      %v298 = vld [vmem:[%s6] sm:$0x1]
      %v300 = vlaneseq
      %v301 = vshrl.u32 %v300, 7
      %v302 = vsub.s32 0, %v301
      %v303 = vrot.slane %v298, %v302
      %v305 = vadd.f32 %v297, %v303
      %v306 = vld [vmem:[%s1] sm:$0xff]
      %v307 = vld [vmem:[%s1 + $0x8] sm:$0xff]
      %v308 = vld [vmem:[%s1 + $0x10] sm:$0xff]
      %v309 = vld [vmem:[%s1 + $0x18] sm:$0xff]
      %v310 = vld [vmem:[%s1 + $0x20] sm:$0xff]
      %v311 = vld [vmem:[%s1 + $0x28] sm:$0xff]
      %v312 = vld [vmem:[%s1 + $0x30] sm:$0xff]
      %v313 = vld [vmem:[%s1 + $0x38] sm:$0xff]
      %v314 = vld [vmem:[%s1 + $0x40] sm:$0xff]
      %v315 = vld [vmem:[%s1 + $0x48] sm:$0xff]
      %v316 = vld [vmem:[%s1 + $0x50] sm:$0xff]
      %v317 = vld [vmem:[%s1 + $0x58] sm:$0xff]
      %v318 = vld [vmem:[%s1 + $0x60] sm:$0xff]
      %v319 = vld [vmem:[%s1 + $0x68] sm:$0xff]
      %v320 = vld [vmem:[%s1 + $0x70] sm:$0xff]
      %v321 = vld [vmem:[%s1 + $0x78] sm:$0xff]
      %v322 = vld [vmem:[%s2] sm:$0x1]
      %v324 = vlaneseq
      %v325 = vshrl.u32 %v324, 7
      %v326 = vsub.s32 0, %v325
      %v327 = vrot.slane %v322, %v326
      %329 = vmatprep.subr.mxu0 0.0
      %330 = vmatpush1.msra.mxu0 %v321
      %331 = vmatprep.subr.mxu0 0.0
      %332 = vmatpush1.msra.mxu0 %v320
      %333 = vmatprep.subr.mxu0 0.0
      %334 = vmatpush1.msra.mxu0 %v319
      %335 = vmatprep.subr.mxu0 0.0
      %336 = vmatpush1.msra.mxu0 %v318
      %337 = vmatprep.subr.mxu0 0.0
      %338 = vmatpush1.msra.mxu0 %v317
      %339 = vmatprep.subr.mxu0 0.0
      %340 = vmatpush1.msra.mxu0 %v316
      %341 = vmatprep.subr.mxu0 0.0
      %342 = vmatpush1.msra.mxu0 %v315
      %343 = vmatprep.subr.mxu0 0.0
      %344 = vmatpush1.msra.mxu0 %v314
      %345 = vmatprep.subr.mxu0 0.0
      %346 = vmatpush1.msra.mxu0 %v313
      %347 = vmatprep.subr.mxu0 0.0
      %348 = vmatpush1.msra.mxu0 %v312
      %349 = vmatprep.subr.mxu0 0.0
      %350 = vmatpush1.msra.mxu0 %v311
      %351 = vmatprep.subr.mxu0 0.0
      %352 = vmatpush1.msra.mxu0 %v310
      %353 = vmatprep.subr.mxu0 0.0
      %354 = vmatpush1.msra.mxu0 %v309
      %355 = vmatprep.subr.mxu0 0.0
      %356 = vmatpush1.msra.mxu0 %v308
      %357 = vmatprep.subr.mxu0 0.0
      %358 = vmatpush1.msra.mxu0 %v307
      %359 = vmatprep.subr.mxu0 0.0
      %360 = vmatpush1.msra.mxu0 %v306
      %361 = vmatprep.subr.mxu0 0.0
      %362 = vmatpush2.msra.mxu0 0.0
      %363 = vmatprep.subr.mxu0 0.0
      %364 = vmatpush2.msra.mxu0 0.0
      %365 = vmatprep.subr.mxu0 0.0
      %366 = vmatpush2.msra.mxu0 0.0
      %367 = vmatprep.subr.mxu0 0.0
      %368 = vmatpush2.msra.mxu0 0.0
      %369 = vmatprep.subr.mxu0 0.0
      %370 = vmatpush2.msra.mxu0 0.0
      %371 = vmatprep.subr.mxu0 0.0
      %372 = vmatpush2.msra.mxu0 0.0
      %373 = vmatprep.subr.mxu0 0.0
      %374 = vmatpush2.msra.mxu0 0.0
      %375 = vmatprep.subr.mxu0 0.0
      %376 = vmatpush2.msra.mxu0 0.0
      %377 = vmatprep.subr.mxu0 0.0
      %378 = vmatpush2.msra.mxu0 0.0
      %379 = vmatprep.subr.mxu0 0.0
      %380 = vmatpush2.msra.mxu0 0.0
      %381 = vmatprep.subr.mxu0 0.0
      %382 = vmatpush2.msra.mxu0 0.0
      %383 = vmatprep.subr.mxu0 0.0
      %384 = vmatpush2.msra.mxu0 0.0
      %385 = vmatprep.subr.mxu0 0.0
      %386 = vmatpush2.msra.mxu0 0.0
      %387 = vmatprep.subr.mxu0 0.0
      %388 = vmatpush2.msra.mxu0 0.0
      %389 = vmatprep.subr.mxu0 0.0
      %390 = vmatpush2.msra.mxu0 0.0
      %391 = vmatprep.subr.mxu0 0.0
      %392 = vmatpush2.msra.mxu0 0.0
      %393 = vmatprep.mubr.f32.mxu0 0.0
      %394 = vmatmul.mubr.f32.gmra.mxu0 %v305
      %v395 = vpop.f32.mrf.mxu0
      %v396 = vadd.f32 %v327, %v395
      %v397 = vpop.f32.mrf.mxu0
      %398 = vdwg.mxu0
      %v399 = vmul.f32 %v396, 0.5
      %v400 = vmul.f32 %v396, 0.70710677
      %v401 = verf.f32.pop %v400
      %v402 = vadd.f32 %v401, 1.0
      %v403 = vmul.f32 %v399, %v402
      %v404 = vld [vmem:[%s3] sm:$0xff]
      %v405 = vld [vmem:[%s3 + $0x8] sm:$0xff]
      %v406 = vld [vmem:[%s3 + $0x10] sm:$0xff]
      %v407 = vld [vmem:[%s3 + $0x18] sm:$0xff]
      %v408 = vld [vmem:[%s3 + $0x20] sm:$0xff]
      %v409 = vld [vmem:[%s3 + $0x28] sm:$0xff]
      %v410 = vld [vmem:[%s3 + $0x30] sm:$0xff]
      %v411 = vld [vmem:[%s3 + $0x38] sm:$0xff]
      %v412 = vld [vmem:[%s3 + $0x40] sm:$0xff]
      %v413 = vld [vmem:[%s3 + $0x48] sm:$0xff]
      %v414 = vld [vmem:[%s3 + $0x50] sm:$0xff]
      %v415 = vld [vmem:[%s3 + $0x58] sm:$0xff]
      %v416 = vld [vmem:[%s3 + $0x60] sm:$0xff]
      %v417 = vld [vmem:[%s3 + $0x68] sm:$0xff]
      %v418 = vld [vmem:[%s3 + $0x70] sm:$0xff]
      %v419 = vld [vmem:[%s3 + $0x78] sm:$0xff]
      %v420 = vld [vmem:[%s4] sm:$0x1]
      %v422 = vlaneseq
      %v423 = vshrl.u32 %v422, 7
      %v424 = vsub.s32 0, %v423
      %v425 = vrot.slane %v420, %v424
      %427 = vmatprep.subr.mxu0 0.0
      %428 = vmatpush1.msra.mxu0 %v419
      %429 = vmatprep.subr.mxu0 0.0
      %430 = vmatpush1.msra.mxu0 %v418
      %431 = vmatprep.subr.mxu0 0.0
      %432 = vmatpush1.msra.mxu0 %v417
      %433 = vmatprep.subr.mxu0 0.0
      %434 = vmatpush1.msra.mxu0 %v416
      %435 = vmatprep.subr.mxu0 0.0
      %436 = vmatpush1.msra.mxu0 %v415
      %437 = vmatprep.subr.mxu0 0.0
      %438 = vmatpush1.msra.mxu0 %v414
      %439 = vmatprep.subr.mxu0 0.0
      %440 = vmatpush1.msra.mxu0 %v413
      %441 = vmatprep.subr.mxu0 0.0
      %442 = vmatpush1.msra.mxu0 %v412
      %443 = vmatprep.subr.mxu0 0.0
      %444 = vmatpush1.msra.mxu0 %v411
      %445 = vmatprep.subr.mxu0 0.0
      %446 = vmatpush1.msra.mxu0 %v410
      %447 = vmatprep.subr.mxu0 0.0
      %448 = vmatpush1.msra.mxu0 %v409
      %449 = vmatprep.subr.mxu0 0.0
      %450 = vmatpush1.msra.mxu0 %v408
      %451 = vmatprep.subr.mxu0 0.0
      %452 = vmatpush1.msra.mxu0 %v407
      %453 = vmatprep.subr.mxu0 0.0
      %454 = vmatpush1.msra.mxu0 %v406
      %455 = vmatprep.subr.mxu0 0.0
      %456 = vmatpush1.msra.mxu0 %v405
      %457 = vmatprep.subr.mxu0 0.0
      %458 = vmatpush1.msra.mxu0 %v404
      %459 = vmatprep.subr.mxu0 0.0
      %460 = vmatpush2.msra.mxu0 0.0
      %461 = vmatprep.subr.mxu0 0.0
      %462 = vmatpush2.msra.mxu0 0.0
      %463 = vmatprep.subr.mxu0 0.0
      %464 = vmatpush2.msra.mxu0 0.0
      %465 = vmatprep.subr.mxu0 0.0
      %466 = vmatpush2.msra.mxu0 0.0
      %467 = vmatprep.subr.mxu0 0.0
      %468 = vmatpush2.msra.mxu0 0.0
      %469 = vmatprep.subr.mxu0 0.0
      %470 = vmatpush2.msra.mxu0 0.0
      %471 = vmatprep.subr.mxu0 0.0
      %472 = vmatpush2.msra.mxu0 0.0
      %473 = vmatprep.subr.mxu0 0.0
      %474 = vmatpush2.msra.mxu0 0.0
      %475 = vmatprep.subr.mxu0 0.0
      %476 = vmatpush2.msra.mxu0 0.0
      %477 = vmatprep.subr.mxu0 0.0
      %478 = vmatpush2.msra.mxu0 0.0
      %479 = vmatprep.subr.mxu0 0.0
      %480 = vmatpush2.msra.mxu0 0.0
      %481 = vmatprep.subr.mxu0 0.0
      %482 = vmatpush2.msra.mxu0 0.0
      %483 = vmatprep.subr.mxu0 0.0
      %484 = vmatpush2.msra.mxu0 0.0
      %485 = vmatprep.subr.mxu0 0.0
      %486 = vmatpush2.msra.mxu0 0.0
      %487 = vmatprep.subr.mxu0 0.0
      %488 = vmatpush2.msra.mxu0 0.0
      %489 = vmatprep.subr.mxu0 0.0
      %490 = vmatpush2.msra.mxu0 0.0
      %491 = vmatprep.mubr.f32.mxu0 0.0
      %492 = vmatmul.mubr.f32.gmra.mxu0 %v403
      %v493 = vpop.f32.mrf.mxu0
      %v494 = vadd.f32 %v425, %v493
      %v495 = vpop.f32.mrf.mxu0
      %496 = vdwg.mxu0
      %v497 = vadd.f32 %v494, %v274
      %498 = vst [vmem:[%s273] sm:$0xff] %v497
      %p499 = scmp.lt.s32.totalorder %s18, 1
      %s500 = scalar_select %p499, %s18, 1
      %s501 = smul.addr %s500, 8
      %s502 = scalar_lea.vmem %s7, %s501
      // Predicated region
      $region49: #{adapter_layer.1} parent=47 // pred_check
        %p503 = pneg %p188
      $region50: #{adapter_layer.1} parent=47 // pred_check_branch
        %505 = sbr.rel (%p503) target = $region52
      $region51: #{adapter_layer.1} parent=47 // pred_region
        _
      $region52: #{adapter_layer.1} parent=47 // pred_fallthru
        _
    $region48: #{adapter_layer.1} parent=5 // pred_fallthru
      _
    %p506 = scmp.le.s32.totalorder 2, %s13
    // Predicated region
    $region53: #{adapter_layer.1} parent=5 // pred_check
      %p507 = pneg %p506
    $region54: #{adapter_layer.1} parent=5 // pred_check_branch
      %509 = sbr.rel (%p507) target = $region56
    $region55: #{adapter_layer.1} parent=5 // pred_region
      %s510 = ssub.s32 %s13, 2
      // Predicated region
      $region57: #{adapter_layer.1} parent=55 // pred_check
        %p511 = pneg %p194
      $region58: #{adapter_layer.1} parent=55 // pred_check_branch
        %513 = sbr.rel (%p511) target = $region60
      $region59: #{adapter_layer.1} parent=55 // pred_region
        %p514 = scmp.lt.s32.totalorder %s19, 1
        %s515 = scalar_select %p514, %s19, 1
        %s516 = smul.addr %s515, 8
        %s517 = scalar_lea.vmem %s7, %s516
      $region60: #{adapter_layer.1} parent=55 // pred_fallthru
        _
    $region56: #{adapter_layer.1} parent=5 // pred_fallthru
      _
  $region6: #{adapter_layer.1} parent=0 // loop_footer
    %s17 = sadd.s32 1, %s13
  $region7: #{adapter_layer.1} parent=0 // loop_footer_branch
    %12 = sbr.rel target = $region3
  $region8: #{adapter_layer.1} parent=0 // loop_exit
    _

</llo_original>
